<compile_context>
chip_gen: v5e
topology: v5e:2x2
jax: 0.10.0
libtpu: 0.0.40
codegen_flags: <defaults>
</compile_context>

<pallas_src>
import functools

import jax
import jax.numpy as jnp
from jax.experimental import pallas as pl
from jax.experimental.pallas import tpu as pltpu

_BATCH_TILE = 8   # sublane multiple; one grid step per batch tile
_O_PAD = 128      # lane-dense padded width of the fc head


def _lstm_kernel(x_ref, wih_ref, whh_ref, b_ref, wfc_ref, bfc_ref, out_ref,
                 *, seq_len, batch_tile, hidden_size):
    """Full LSTM recurrence + final Linear for one batch tile.

    x_ref  : (T, BT, I)  time-major input slice for this batch tile (f32)
    wih_ref: (I, 4H)     W_ih^T, g rows pre-scaled by 2 (bf16)
    whh_ref: (H, 4H)     W_hh^T, g rows pre-scaled by 2 (bf16)
    b_ref  : (1, 4H)     b_ih + b_hh, g chunk pre-scaled by 2 (f32)
    wfc_ref: (H, 128)    fc.weight^T zero-padded to 128 lanes (f32)
    bfc_ref: (1, 128)    fc.bias zero-padded (f32)
    out_ref: (BT, 128)   lane-dense output tile
    """
    T, B, H = seq_len, batch_tile, hidden_size

    # ---- Hoisted input projection: one bf16 MXU pass + one bias add. ----
    # (T, BT, I) -> (T*BT, I) merges leading dims only; trailing (8,128)
    # tiling is unchanged, so no relayout.
    x2 = x_ref[...].reshape(T * B, x_ref.shape[-1]).astype(jnp.bfloat16)
    gates_x = (
        jnp.dot(x2, wih_ref[...], preferred_element_type=jnp.float32)
        + b_ref[...]
    )  # (T*B, 4H) f32

    whh = whh_ref[...]  # (H, 4H) bf16, loaded once, reused by every step
    # TODO(synk): if a bundle dump shows the RHS being re-pushed each step,
    # stage it once via pltpu.matmul_push_rhs / matmul_acc_lhs / matmul_pop.

    h = jnp.zeros((B, H), jnp.float32)
    c = jnp.zeros((B, H), jnp.float32)

    # ---- Fully unrolled serial recurrence (T small & static). ----
    # TODO(synk): for T >~ 32, spill gates_x to VMEM scratch and switch to
    # lax.fori_loop with per-step loads to bound vreg pressure.
    for t in range(T):
        gates = gates_x[t * B:(t + 1) * B, :] + jnp.dot(
            h.astype(jnp.bfloat16), whh,
            preferred_element_type=jnp.float32)                  # (B, 4H) f32

        # One full-width sigmoid (EUP) over the 128-lane vreg; the g gate is
        # recovered as tanh(x) = 2*sigmoid(2x) - 1 (2x folded into weights).
        sig = jax.nn.sigmoid(gates)
        i_g = sig[:, 0 * H:1 * H]
        f_g = sig[:, 1 * H:2 * H]
        g_g = 2.0 * sig[:, 2 * H:3 * H] - 1.0
        o_g = sig[:, 3 * H:4 * H]

        c = f_g * c + i_g * g_g
        h = o_g * jnp.tanh(c)

    # fc(h_n[-1]); wfc/bfc zero-padded to 128 lanes -> unmasked lane-dense vst.
    out_ref[...] = (
        jnp.dot(h, wfc_ref[...], preferred_element_type=jnp.float32)
        + bfc_ref[...]
    ).astype(out_ref.dtype)


def prepare_params(params):
    """One-time weight layout prep (transpose, bias fusion, 2x g-scale, bf16,
    lane-dense fc padding)."""
    w_ih, w_hh = params["w_ih"], params["w_hh"]
    b_ih, b_hh = params["b_ih"], params["b_hh"]
    w_fc, b_fc = params["w_fc"], params["b_fc"]
    H = w_hh.shape[1]
    O = w_fc.shape[0]

    # PyTorch gate row order is [i | f | g | o]; scale the g rows by 2 so the
    # kernel can use tanh(x) = 2*sigmoid(2x) - 1 with a single sigmoid.
    gate_scale = jnp.concatenate([
        jnp.ones((2 * H,), jnp.float32),
        jnp.full((H,), 2.0, jnp.float32),
        jnp.ones((H,), jnp.float32),
    ])
    wih_t = jnp.transpose(w_ih * gate_scale[:, None]).astype(jnp.bfloat16)  # (I, 4H)
    whh_t = jnp.transpose(w_hh * gate_scale[:, None]).astype(jnp.bfloat16)  # (H, 4H)
    bias = ((b_ih + b_hh) * gate_scale).reshape(1, -1).astype(jnp.float32)  # (1, 4H)

    wfc_t = jnp.zeros((H, _O_PAD), jnp.float32).at[:, :O].set(jnp.transpose(w_fc))
    bfc = jnp.zeros((1, _O_PAD), jnp.float32).at[0, :O].set(b_fc)
    return {"wih_t": wih_t, "whh_t": whh_t, "bias": bias,
            "wfc_t": wfc_t, "bfc": bfc, "out_features": int(O)}


@functools.partial(jax.jit, static_argnums=(6,))
def _forward(x, wih_t, whh_t, bias, wfc_t, bfc, out_features):
    """x: (B, T, I) f32 (batch_first, like PyTorch). Returns (B, O)."""
    B, T, I = x.shape
    H = whh_t.shape[0]

    # Pad batch to a multiple of the batch tile (sublane multiple); padded
    # rows start from zero state and are sliced off.
    Bp = ((B + _BATCH_TILE - 1) // _BATCH_TILE) * _BATCH_TILE
    x_tm = jnp.transpose(x, (1, 0, 2))                      # (T, B, I) time-major
    if Bp != B:
        x_tm = jnp.pad(x_tm, ((0, 0), (0, Bp - B), (0, 0)))

    kernel = functools.partial(
        _lstm_kernel, seq_len=T, batch_tile=_BATCH_TILE, hidden_size=H)

    # TODO(synk): if T*B ever grows, stream x/gates over a T grid (or
    # pltpu.emit_pipeline) before raising vmem_limit_bytes (v7x = 64 MiB VMEM).
    out = pl.pallas_call(
        kernel,
        out_shape=jax.ShapeDtypeStruct((Bp, _O_PAD), jnp.float32),
        grid=(Bp // _BATCH_TILE,),
        in_specs=[
            pl.BlockSpec((T, _BATCH_TILE, I), lambda b: (0, b, 0)),  # x tile
            pl.BlockSpec((I, 4 * H), lambda b: (0, 0)),              # W_ih^T
            pl.BlockSpec((H, 4 * H), lambda b: (0, 0)),              # W_hh^T
            pl.BlockSpec((1, 4 * H), lambda b: (0, 0)),              # fused bias
            pl.BlockSpec((H, _O_PAD), lambda b: (0, 0)),             # W_fc^T (padded)
            pl.BlockSpec((1, _O_PAD), lambda b: (0, 0)),             # b_fc (padded)
        ],
        out_specs=pl.BlockSpec((_BATCH_TILE, _O_PAD), lambda b: (b, 0)),
        compiler_params=pltpu.CompilerParams(
            dimension_semantics=("parallel",)),   # v7x: batch tiles across TCs
    )(x_tm, wih_t, whh_t, bias, wfc_t, bfc)
    return out[:B, :out_features]


def lstm_model_forward_prepared(x, prep):
    return _forward(x, prep["wih_t"], prep["whh_t"], prep["bias"],
                    prep["wfc_t"], prep["bfc"], prep["out_features"])


def lstm_model_forward(x, params):
    """Convenience wrapper: prep weights then run (prefer prepare_params once)."""
    return lstm_model_forward_prepared(x, prepare_params(params))


def _reference_forward(x, params):
    """Pure-JAX f32 reference replicating torch.nn.LSTM (gate order i,f,g,o) + Linear."""
    w_ih, w_hh, b_ih, b_hh, w_fc, b_fc = (
        params["w_ih"], params["w_hh"], params["b_ih"],
        params["b_hh"], params["w_fc"], params["b_fc"],
    )
    B, T, I = x.shape
    H = w_hh.shape[1]
    h = jnp.zeros((B, H), jnp.float32)
    c = jnp.zeros((B, H), jnp.float32)
    for t in range(T):
        gates = x[:, t, :] @ w_ih.T + b_ih + h @ w_hh.T + b_hh
        i_g = jax.nn.sigmoid(gates[:, 0 * H:1 * H])
        f_g = jax.nn.sigmoid(gates[:, 1 * H:2 * H])
        g_g = jnp.tanh(gates[:, 2 * H:3 * H])
        o_g = jax.nn.sigmoid(gates[:, 3 * H:4 * H])
        c = f_g * c + i_g * g_g
        h = o_g * jnp.tanh(c)
    return h @ w_fc.T + b_fc


def init_params(key, input_size, hidden_size, is_classification):
    """Deterministic init mirroring PyTorch shapes: U(-1/sqrt(H), 1/sqrt(H))."""
    out_size = 2 if is_classification else 1
    k = 1.0 / jnp.sqrt(jnp.float32(hidden_size))
    ks = jax.random.split(key, 6)
    u = lambda kk, shape: jax.random.uniform(kk, shape, jnp.float32, -k, k)
    return {
        "w_ih": u(ks[0], (4 * hidden_size, input_size)),
        "w_hh": u(ks[1], (4 * hidden_size, hidden_size)),
        "b_ih": u(ks[2], (4 * hidden_size,)),
        "b_hh": u(ks[3], (4 * hidden_size,)),
        "w_fc": u(ks[4], (out_size, hidden_size)),
        "b_fc": u(ks[5], (out_size,)),
    }


if __name__ == "__main__":
    # Small shapes consistent with the module: batch=4, seq=8, input_size=8, hidden=32.
    B, T, I, H = 4, 8, 8, 32
    is_classification = True

    key = jax.random.PRNGKey(0)
    k_x, k_p = jax.random.split(key)
    x = jax.random.normal(k_x, (B, T, I), jnp.float32)
    params = init_params(k_p, I, H, is_classification)

    prep = prepare_params(params)                 # one-time weight layout prep
    out = lstm_model_forward_prepared(x, prep)
    out = jax.block_until_ready(out)

    ref = _reference_forward(x, params)
    assert out.shape == (B, 2 if is_classification else 1)
    # bf16 MXU inputs -> compare against the f32 reference with a relaxed tol.
    assert jnp.allclose(out, ref, atol=2e-2, rtol=2e-2), (
        "max abs diff", float(jnp.max(jnp.abs(out - ref))))

    print("KERNEL_OK")
</pallas_src>

<mosaic_0001>
module attributes {stable_mosaic.version = 11 : i64} {
  func.func @_lstm_kernel(%arg0: i32, %arg1: memref<8x8x8xf32, #tpu.memory_space<vmem>>, %arg2: memref<8x128xbf16, #tpu.memory_space<vmem>>, %arg3: memref<32x128xbf16, #tpu.memory_space<vmem>>, %arg4: memref<1x128xf32, #tpu.memory_space<vmem>>, %arg5: memref<32x128xf32, #tpu.memory_space<vmem>>, %arg6: memref<1x128xf32, #tpu.memory_space<vmem>>, %arg7: memref<8x128xf32, #tpu.memory_space<vmem>>) attributes {dimension_semantics = [#tpu.dimension_semantics<parallel>], iteration_bounds = array<i64: 1>, scalar_prefetch = 0 : i64, scratch_operands = 0 : i64, tpu.core_type = #tpu.core_type<tc>, window_params = [{transform_indices = @transform_0, window_bounds = array<i64: 8, 8, 8>}, {pipeline_mode = #tpu.pipeline_mode<synchronous>, transform_indices = @transform_1, window_bounds = array<i64: 8, 128>}, {pipeline_mode = #tpu.pipeline_mode<synchronous>, transform_indices = @transform_2, window_bounds = array<i64: 32, 128>}, {pipeline_mode = #tpu.pipeline_mode<synchronous>, transform_indices = @transform_3, window_bounds = array<i64: 1, 128>}, {pipeline_mode = #tpu.pipeline_mode<synchronous>, transform_indices = @transform_4, window_bounds = array<i64: 32, 128>}, {pipeline_mode = #tpu.pipeline_mode<synchronous>, transform_indices = @transform_5, window_bounds = array<i64: 1, 128>}, {transform_indices = @transform_6, window_bounds = array<i64: 8, 128>}]} {
    %c0 = arith.constant 0 : index
    %c0_0 = arith.constant 0 : index
    %c0_1 = arith.constant 0 : index
    %0 = vector.load %arg1[%c0, %c0_0, %c0_1] : memref<8x8x8xf32, #tpu.memory_space<vmem>>, vector<8x8x8xf32>
    %1 = vector.shape_cast %0 : vector<8x8x8xf32> to vector<64x8xf32>
    %2 = arith.truncf %1 : vector<64x8xf32> to vector<64x8xbf16>
    %c0_2 = arith.constant 0 : index
    %c0_3 = arith.constant 0 : index
    %3 = vector.load %arg2[%c0_2, %c0_3] : memref<8x128xbf16, #tpu.memory_space<vmem>>, vector<8x128xbf16>
    %cst = arith.constant dense<0.000000e+00> : vector<64x128xf32>
    %4 = tpu.matmul %2, %3, %cst {dimension_numbers = #tpu.dot_dimension_numbers<[1], [0], [0], [1], [0, 0, 1, 1], [], []>} : vector<64x8xbf16>, vector<8x128xbf16>, vector<64x128xf32> -> vector<64x128xf32>
    %c0_4 = arith.constant 0 : index
    %c0_5 = arith.constant 0 : index
    %5 = vector.load %arg4[%c0_4, %c0_5] : memref<1x128xf32, #tpu.memory_space<vmem>>, vector<1x128xf32>
    %6 = vector.broadcast %5 : vector<1x128xf32> to vector<64x128xf32>
    %7 = arith.addf %4, %6 : vector<64x128xf32>
    %c0_6 = arith.constant 0 : index
    %c0_7 = arith.constant 0 : index
    %8 = vector.load %arg3[%c0_6, %c0_7] : memref<32x128xbf16, #tpu.memory_space<vmem>>, vector<32x128xbf16>
    %cst_8 = arith.constant 0.000000e+00 : f32
    %9 = vector.broadcast %cst_8 : f32 to vector<8x32xf32>
    %cst_9 = arith.constant 0.000000e+00 : f32
    %10 = vector.broadcast %cst_9 : f32 to vector<8x32xf32>
    %11 = vector.extract_strided_slice %7 {offsets = [0, 0], sizes = [8, 128], strides = [1, 1]} : vector<64x128xf32> to vector<8x128xf32>
    %12 = arith.truncf %9 : vector<8x32xf32> to vector<8x32xbf16>
    %cst_10 = arith.constant dense<0.000000e+00> : vector<8x128xf32>
    %13 = tpu.matmul %12, %8, %cst_10 {dimension_numbers = #tpu.dot_dimension_numbers<[1], [0], [0], [1], [0, 0, 1, 1], [], []>} : vector<8x32xbf16>, vector<32x128xbf16>, vector<8x128xf32> -> vector<8x128xf32>
    %14 = arith.addf %11, %13 : vector<8x128xf32>
    %15 = arith.negf %14 : vector<8x128xf32>
    %16 = math.exp %15 : vector<8x128xf32>
    %cst_11 = arith.constant 1.000000e+00 : f32
    %17 = vector.broadcast %cst_11 : f32 to vector<8x128xf32>
    %18 = arith.addf %17, %16 : vector<8x128xf32>
    %19 = arith.divf %17, %18 : vector<8x128xf32>
    %20 = vector.extract_strided_slice %19 {offsets = [0, 0], sizes = [8, 32], strides = [1, 1]} : vector<8x128xf32> to vector<8x32xf32>
    %21 = vector.extract_strided_slice %19 {offsets = [0, 32], sizes = [8, 32], strides = [1, 1]} : vector<8x128xf32> to vector<8x32xf32>
    %22 = vector.extract_strided_slice %19 {offsets = [0, 64], sizes = [8, 32], strides = [1, 1]} : vector<8x128xf32> to vector<8x32xf32>
    %cst_12 = arith.constant 2.000000e+00 : f32
    %23 = vector.broadcast %cst_12 : f32 to vector<8x32xf32>
    %24 = arith.mulf %23, %22 : vector<8x32xf32>
    %cst_13 = arith.constant 1.000000e+00 : f32
    %25 = vector.broadcast %cst_13 : f32 to vector<8x32xf32>
    %26 = arith.subf %24, %25 : vector<8x32xf32>
    %27 = vector.extract_strided_slice %19 {offsets = [0, 96], sizes = [8, 32], strides = [1, 1]} : vector<8x128xf32> to vector<8x32xf32>
    %28 = arith.mulf %21, %10 : vector<8x32xf32>
    %29 = arith.mulf %20, %26 : vector<8x32xf32>
    %30 = arith.addf %28, %29 : vector<8x32xf32>
    %31 = math.tanh %30 : vector<8x32xf32>
    %32 = arith.mulf %27, %31 : vector<8x32xf32>
    %33 = vector.extract_strided_slice %7 {offsets = [8, 0], sizes = [8, 128], strides = [1, 1]} : vector<64x128xf32> to vector<8x128xf32>
    %34 = arith.truncf %32 : vector<8x32xf32> to vector<8x32xbf16>
    %cst_14 = arith.constant dense<0.000000e+00> : vector<8x128xf32>
    %35 = tpu.matmul %34, %8, %cst_14 {dimension_numbers = #tpu.dot_dimension_numbers<[1], [0], [0], [1], [0, 0, 1, 1], [], []>} : vector<8x32xbf16>, vector<32x128xbf16>, vector<8x128xf32> -> vector<8x128xf32>
    %36 = arith.addf %33, %35 : vector<8x128xf32>
    %37 = arith.negf %36 : vector<8x128xf32>
    %38 = math.exp %37 : vector<8x128xf32>
    %cst_15 = arith.constant 1.000000e+00 : f32
    %39 = vector.broadcast %cst_15 : f32 to vector<8x128xf32>
    %40 = arith.addf %39, %38 : vector<8x128xf32>
    %41 = arith.divf %39, %40 : vector<8x128xf32>
    %42 = vector.extract_strided_slice %41 {offsets = [0, 0], sizes = [8, 32], strides = [1, 1]} : vector<8x128xf32> to vector<8x32xf32>
    %43 = vector.extract_strided_slice %41 {offsets = [0, 32], sizes = [8, 32], strides = [1, 1]} : vector<8x128xf32> to vector<8x32xf32>
    %44 = vector.extract_strided_slice %41 {offsets = [0, 64], sizes = [8, 32], strides = [1, 1]} : vector<8x128xf32> to vector<8x32xf32>
    %cst_16 = arith.constant 2.000000e+00 : f32
    %45 = vector.broadcast %cst_16 : f32 to vector<8x32xf32>
    %46 = arith.mulf %45, %44 : vector<8x32xf32>
    %cst_17 = arith.constant 1.000000e+00 : f32
    %47 = vector.broadcast %cst_17 : f32 to vector<8x32xf32>
    %48 = arith.subf %46, %47 : vector<8x32xf32>
    %49 = vector.extract_strided_slice %41 {offsets = [0, 96], sizes = [8, 32], strides = [1, 1]} : vector<8x128xf32> to vector<8x32xf32>
    %50 = arith.mulf %43, %30 : vector<8x32xf32>
    %51 = arith.mulf %42, %48 : vector<8x32xf32>
    %52 = arith.addf %50, %51 : vector<8x32xf32>
    %53 = math.tanh %52 : vector<8x32xf32>
    %54 = arith.mulf %49, %53 : vector<8x32xf32>
    %55 = vector.extract_strided_slice %7 {offsets = [16, 0], sizes = [8, 128], strides = [1, 1]} : vector<64x128xf32> to vector<8x128xf32>
    %56 = arith.truncf %54 : vector<8x32xf32> to vector<8x32xbf16>
    %cst_18 = arith.constant dense<0.000000e+00> : vector<8x128xf32>
    %57 = tpu.matmul %56, %8, %cst_18 {dimension_numbers = #tpu.dot_dimension_numbers<[1], [0], [0], [1], [0, 0, 1, 1], [], []>} : vector<8x32xbf16>, vector<32x128xbf16>, vector<8x128xf32> -> vector<8x128xf32>
    %58 = arith.addf %55, %57 : vector<8x128xf32>
    %59 = arith.negf %58 : vector<8x128xf32>
    %60 = math.exp %59 : vector<8x128xf32>
    %cst_19 = arith.constant 1.000000e+00 : f32
    %61 = vector.broadcast %cst_19 : f32 to vector<8x128xf32>
    %62 = arith.addf %61, %60 : vector<8x128xf32>
    %63 = arith.divf %61, %62 : vector<8x128xf32>
    %64 = vector.extract_strided_slice %63 {offsets = [0, 0], sizes = [8, 32], strides = [1, 1]} : vector<8x128xf32> to vector<8x32xf32>
    %65 = vector.extract_strided_slice %63 {offsets = [0, 32], sizes = [8, 32], strides = [1, 1]} : vector<8x128xf32> to vector<8x32xf32>
    %66 = vector.extract_strided_slice %63 {offsets = [0, 64], sizes = [8, 32], strides = [1, 1]} : vector<8x128xf32> to vector<8x32xf32>
    %cst_20 = arith.constant 2.000000e+00 : f32
    %67 = vector.broadcast %cst_20 : f32 to vector<8x32xf32>
    %68 = arith.mulf %67, %66 : vector<8x32xf32>
    %cst_21 = arith.constant 1.000000e+00 : f32
    %69 = vector.broadcast %cst_21 : f32 to vector<8x32xf32>
    %70 = arith.subf %68, %69 : vector<8x32xf32>
    %71 = vector.extract_strided_slice %63 {offsets = [0, 96], sizes = [8, 32], strides = [1, 1]} : vector<8x128xf32> to vector<8x32xf32>
    %72 = arith.mulf %65, %52 : vector<8x32xf32>
    %73 = arith.mulf %64, %70 : vector<8x32xf32>
    %74 = arith.addf %72, %73 : vector<8x32xf32>
    %75 = math.tanh %74 : vector<8x32xf32>
    %76 = arith.mulf %71, %75 : vector<8x32xf32>
    %77 = vector.extract_strided_slice %7 {offsets = [24, 0], sizes = [8, 128], strides = [1, 1]} : vector<64x128xf32> to vector<8x128xf32>
    %78 = arith.truncf %76 : vector<8x32xf32> to vector<8x32xbf16>
    %cst_22 = arith.constant dense<0.000000e+00> : vector<8x128xf32>
    %79 = tpu.matmul %78, %8, %cst_22 {dimension_numbers = #tpu.dot_dimension_numbers<[1], [0], [0], [1], [0, 0, 1, 1], [], []>} : vector<8x32xbf16>, vector<32x128xbf16>, vector<8x128xf32> -> vector<8x128xf32>
    %80 = arith.addf %77, %79 : vector<8x128xf32>
    %81 = arith.negf %80 : vector<8x128xf32>
    %82 = math.exp %81 : vector<8x128xf32>
    %cst_23 = arith.constant 1.000000e+00 : f32
    %83 = vector.broadcast %cst_23 : f32 to vector<8x128xf32>
    %84 = arith.addf %83, %82 : vector<8x128xf32>
    %85 = arith.divf %83, %84 : vector<8x128xf32>
    %86 = vector.extract_strided_slice %85 {offsets = [0, 0], sizes = [8, 32], strides = [1, 1]} : vector<8x128xf32> to vector<8x32xf32>
    %87 = vector.extract_strided_slice %85 {offsets = [0, 32], sizes = [8, 32], strides = [1, 1]} : vector<8x128xf32> to vector<8x32xf32>
    %88 = vector.extract_strided_slice %85 {offsets = [0, 64], sizes = [8, 32], strides = [1, 1]} : vector<8x128xf32> to vector<8x32xf32>
    %cst_24 = arith.constant 2.000000e+00 : f32
    %89 = vector.broadcast %cst_24 : f32 to vector<8x32xf32>
    %90 = arith.mulf %89, %88 : vector<8x32xf32>
    %cst_25 = arith.constant 1.000000e+00 : f32
    %91 = vector.broadcast %cst_25 : f32 to vector<8x32xf32>
    %92 = arith.subf %90, %91 : vector<8x32xf32>
    %93 = vector.extract_strided_slice %85 {offsets = [0, 96], sizes = [8, 32], strides = [1, 1]} : vector<8x128xf32> to vector<8x32xf32>
    %94 = arith.mulf %87, %74 : vector<8x32xf32>
    %95 = arith.mulf %86, %92 : vector<8x32xf32>
    %96 = arith.addf %94, %95 : vector<8x32xf32>
    %97 = math.tanh %96 : vector<8x32xf32>
    %98 = arith.mulf %93, %97 : vector<8x32xf32>
    %99 = vector.extract_strided_slice %7 {offsets = [32, 0], sizes = [8, 128], strides = [1, 1]} : vector<64x128xf32> to vector<8x128xf32>
    %100 = arith.truncf %98 : vector<8x32xf32> to vector<8x32xbf16>
    %cst_26 = arith.constant dense<0.000000e+00> : vector<8x128xf32>
    %101 = tpu.matmul %100, %8, %cst_26 {dimension_numbers = #tpu.dot_dimension_numbers<[1], [0], [0], [1], [0, 0, 1, 1], [], []>} : vector<8x32xbf16>, vector<32x128xbf16>, vector<8x128xf32> -> vector<8x128xf32>
    %102 = arith.addf %99, %101 : vector<8x128xf32>
    %103 = arith.negf %102 : vector<8x128xf32>
    %104 = math.exp %103 : vector<8x128xf32>
    %cst_27 = arith.constant 1.000000e+00 : f32
    %105 = vector.broadcast %cst_27 : f32 to vector<8x128xf32>
    %106 = arith.addf %105, %104 : vector<8x128xf32>
    %107 = arith.divf %105, %106 : vector<8x128xf32>
    %108 = vector.extract_strided_slice %107 {offsets = [0, 0], sizes = [8, 32], strides = [1, 1]} : vector<8x128xf32> to vector<8x32xf32>
    %109 = vector.extract_strided_slice %107 {offsets = [0, 32], sizes = [8, 32], strides = [1, 1]} : vector<8x128xf32> to vector<8x32xf32>
    %110 = vector.extract_strided_slice %107 {offsets = [0, 64], sizes = [8, 32], strides = [1, 1]} : vector<8x128xf32> to vector<8x32xf32>
    %cst_28 = arith.constant 2.000000e+00 : f32
    %111 = vector.broadcast %cst_28 : f32 to vector<8x32xf32>
    %112 = arith.mulf %111, %110 : vector<8x32xf32>
    %cst_29 = arith.constant 1.000000e+00 : f32
    %113 = vector.broadcast %cst_29 : f32 to vector<8x32xf32>
    %114 = arith.subf %112, %113 : vector<8x32xf32>
    %115 = vector.extract_strided_slice %107 {offsets = [0, 96], sizes = [8, 32], strides = [1, 1]} : vector<8x128xf32> to vector<8x32xf32>
    %116 = arith.mulf %109, %96 : vector<8x32xf32>
    %117 = arith.mulf %108, %114 : vector<8x32xf32>
    %118 = arith.addf %116, %117 : vector<8x32xf32>
    %119 = math.tanh %118 : vector<8x32xf32>
    %120 = arith.mulf %115, %119 : vector<8x32xf32>
    %121 = vector.extract_strided_slice %7 {offsets = [40, 0], sizes = [8, 128], strides = [1, 1]} : vector<64x128xf32> to vector<8x128xf32>
    %122 = arith.truncf %120 : vector<8x32xf32> to vector<8x32xbf16>
    %cst_30 = arith.constant dense<0.000000e+00> : vector<8x128xf32>
    %123 = tpu.matmul %122, %8, %cst_30 {dimension_numbers = #tpu.dot_dimension_numbers<[1], [0], [0], [1], [0, 0, 1, 1], [], []>} : vector<8x32xbf16>, vector<32x128xbf16>, vector<8x128xf32> -> vector<8x128xf32>
    %124 = arith.addf %121, %123 : vector<8x128xf32>
    %125 = arith.negf %124 : vector<8x128xf32>
    %126 = math.exp %125 : vector<8x128xf32>
    %cst_31 = arith.constant 1.000000e+00 : f32
    %127 = vector.broadcast %cst_31 : f32 to vector<8x128xf32>
    %128 = arith.addf %127, %126 : vector<8x128xf32>
    %129 = arith.divf %127, %128 : vector<8x128xf32>
    %130 = vector.extract_strided_slice %129 {offsets = [0, 0], sizes = [8, 32], strides = [1, 1]} : vector<8x128xf32> to vector<8x32xf32>
    %131 = vector.extract_strided_slice %129 {offsets = [0, 32], sizes = [8, 32], strides = [1, 1]} : vector<8x128xf32> to vector<8x32xf32>
    %132 = vector.extract_strided_slice %129 {offsets = [0, 64], sizes = [8, 32], strides = [1, 1]} : vector<8x128xf32> to vector<8x32xf32>
    %cst_32 = arith.constant 2.000000e+00 : f32
    %133 = vector.broadcast %cst_32 : f32 to vector<8x32xf32>
    %134 = arith.mulf %133, %132 : vector<8x32xf32>
    %cst_33 = arith.constant 1.000000e+00 : f32
    %135 = vector.broadcast %cst_33 : f32 to vector<8x32xf32>
    %136 = arith.subf %134, %135 : vector<8x32xf32>
    %137 = vector.extract_strided_slice %129 {offsets = [0, 96], sizes = [8, 32], strides = [1, 1]} : vector<8x128xf32> to vector<8x32xf32>
    %138 = arith.mulf %131, %118 : vector<8x32xf32>
    %139 = arith.mulf %130, %136 : vector<8x32xf32>
    %140 = arith.addf %138, %139 : vector<8x32xf32>
    %141 = math.tanh %140 : vector<8x32xf32>
    %142 = arith.mulf %137, %141 : vector<8x32xf32>
    %143 = vector.extract_strided_slice %7 {offsets = [48, 0], sizes = [8, 128], strides = [1, 1]} : vector<64x128xf32> to vector<8x128xf32>
    %144 = arith.truncf %142 : vector<8x32xf32> to vector<8x32xbf16>
    %cst_34 = arith.constant dense<0.000000e+00> : vector<8x128xf32>
    %145 = tpu.matmul %144, %8, %cst_34 {dimension_numbers = #tpu.dot_dimension_numbers<[1], [0], [0], [1], [0, 0, 1, 1], [], []>} : vector<8x32xbf16>, vector<32x128xbf16>, vector<8x128xf32> -> vector<8x128xf32>
    %146 = arith.addf %143, %145 : vector<8x128xf32>
    %147 = arith.negf %146 : vector<8x128xf32>
    %148 = math.exp %147 : vector<8x128xf32>
    %cst_35 = arith.constant 1.000000e+00 : f32
    %149 = vector.broadcast %cst_35 : f32 to vector<8x128xf32>
    %150 = arith.addf %149, %148 : vector<8x128xf32>
    %151 = arith.divf %149, %150 : vector<8x128xf32>
    %152 = vector.extract_strided_slice %151 {offsets = [0, 0], sizes = [8, 32], strides = [1, 1]} : vector<8x128xf32> to vector<8x32xf32>
    %153 = vector.extract_strided_slice %151 {offsets = [0, 32], sizes = [8, 32], strides = [1, 1]} : vector<8x128xf32> to vector<8x32xf32>
    %154 = vector.extract_strided_slice %151 {offsets = [0, 64], sizes = [8, 32], strides = [1, 1]} : vector<8x128xf32> to vector<8x32xf32>
    %cst_36 = arith.constant 2.000000e+00 : f32
    %155 = vector.broadcast %cst_36 : f32 to vector<8x32xf32>
    %156 = arith.mulf %155, %154 : vector<8x32xf32>
    %cst_37 = arith.constant 1.000000e+00 : f32
    %157 = vector.broadcast %cst_37 : f32 to vector<8x32xf32>
    %158 = arith.subf %156, %157 : vector<8x32xf32>
    %159 = vector.extract_strided_slice %151 {offsets = [0, 96], sizes = [8, 32], strides = [1, 1]} : vector<8x128xf32> to vector<8x32xf32>
    %160 = arith.mulf %153, %140 : vector<8x32xf32>
    %161 = arith.mulf %152, %158 : vector<8x32xf32>
    %162 = arith.addf %160, %161 : vector<8x32xf32>
    %163 = math.tanh %162 : vector<8x32xf32>
    %164 = arith.mulf %159, %163 : vector<8x32xf32>
    %165 = vector.extract_strided_slice %7 {offsets = [56, 0], sizes = [8, 128], strides = [1, 1]} : vector<64x128xf32> to vector<8x128xf32>
    %166 = arith.truncf %164 : vector<8x32xf32> to vector<8x32xbf16>
    %cst_38 = arith.constant dense<0.000000e+00> : vector<8x128xf32>
    %167 = tpu.matmul %166, %8, %cst_38 {dimension_numbers = #tpu.dot_dimension_numbers<[1], [0], [0], [1], [0, 0, 1, 1], [], []>} : vector<8x32xbf16>, vector<32x128xbf16>, vector<8x128xf32> -> vector<8x128xf32>
    %168 = arith.addf %165, %167 : vector<8x128xf32>
    %169 = arith.negf %168 : vector<8x128xf32>
    %170 = math.exp %169 : vector<8x128xf32>
    %cst_39 = arith.constant 1.000000e+00 : f32
    %171 = vector.broadcast %cst_39 : f32 to vector<8x128xf32>
    %172 = arith.addf %171, %170 : vector<8x128xf32>
    %173 = arith.divf %171, %172 : vector<8x128xf32>
    %174 = vector.extract_strided_slice %173 {offsets = [0, 0], sizes = [8, 32], strides = [1, 1]} : vector<8x128xf32> to vector<8x32xf32>
    %175 = vector.extract_strided_slice %173 {offsets = [0, 32], sizes = [8, 32], strides = [1, 1]} : vector<8x128xf32> to vector<8x32xf32>
    %176 = vector.extract_strided_slice %173 {offsets = [0, 64], sizes = [8, 32], strides = [1, 1]} : vector<8x128xf32> to vector<8x32xf32>
    %cst_40 = arith.constant 2.000000e+00 : f32
    %177 = vector.broadcast %cst_40 : f32 to vector<8x32xf32>
    %178 = arith.mulf %177, %176 : vector<8x32xf32>
    %cst_41 = arith.constant 1.000000e+00 : f32
    %179 = vector.broadcast %cst_41 : f32 to vector<8x32xf32>
    %180 = arith.subf %178, %179 : vector<8x32xf32>
    %181 = vector.extract_strided_slice %173 {offsets = [0, 96], sizes = [8, 32], strides = [1, 1]} : vector<8x128xf32> to vector<8x32xf32>
    %182 = arith.mulf %175, %162 : vector<8x32xf32>
    %183 = arith.mulf %174, %180 : vector<8x32xf32>
    %184 = arith.addf %182, %183 : vector<8x32xf32>
    %185 = math.tanh %184 : vector<8x32xf32>
    %186 = arith.mulf %181, %185 : vector<8x32xf32>
    %c0_42 = arith.constant 0 : index
    %c0_43 = arith.constant 0 : index
    %187 = vector.load %arg5[%c0_42, %c0_43] : memref<32x128xf32, #tpu.memory_space<vmem>>, vector<32x128xf32>
    %cst_44 = arith.constant dense<0.000000e+00> : vector<8x128xf32>
    %188 = tpu.matmul %186, %187, %cst_44 {dimension_numbers = #tpu.dot_dimension_numbers<[1], [0], [0], [1], [0, 0, 1, 1], [], []>} : vector<8x32xf32>, vector<32x128xf32>, vector<8x128xf32> -> vector<8x128xf32>
    %c0_45 = arith.constant 0 : index
    %c0_46 = arith.constant 0 : index
    %189 = vector.load %arg6[%c0_45, %c0_46] : memref<1x128xf32, #tpu.memory_space<vmem>>, vector<1x128xf32>
    %190 = vector.broadcast %189 : vector<1x128xf32> to vector<8x128xf32>
    %191 = arith.addf %188, %190 : vector<8x128xf32>
    %c0_47 = arith.constant 0 : index
    %c0_48 = arith.constant 0 : index
    %192 = vector.load %arg7[%c0_47, %c0_48] : memref<8x128xf32, #tpu.memory_space<vmem>>, vector<8x128xf32>
    tpu.vector_store %arg7[%c0_47, %c0_48], %191 {strides = array<i32>} : memref<8x128xf32, #tpu.memory_space<vmem>>, vector<8x128xf32>,
    return
  }
  func.func @transform_0(%arg0: i32) -> (i32, i32, i32) {
    %c0_i32 = arith.constant 0 : i32
    %c0_i32_0 = arith.constant 0 : i32
    %c0_i32_1 = arith.constant 0 : i32
    return %c0_i32, %arg0, %c0_i32_0 : i32, i32, i32
  }
  func.func @transform_1(%arg0: i32) -> (i32, i32) {
    %c0_i32 = arith.constant 0 : i32
    %c0_i32_0 = arith.constant 0 : i32
    %c0_i32_1 = arith.constant 0 : i32
    return %c0_i32, %c0_i32_0 : i32, i32
  }
  func.func @transform_2(%arg0: i32) -> (i32, i32) {
    %c0_i32 = arith.constant 0 : i32
    %c0_i32_0 = arith.constant 0 : i32
    %c0_i32_1 = arith.constant 0 : i32
    return %c0_i32, %c0_i32_0 : i32, i32
  }
  func.func @transform_3(%arg0: i32) -> (i32, i32) {
    %c0_i32 = arith.constant 0 : i32
    %c0_i32_0 = arith.constant 0 : i32
    %c0_i32_1 = arith.constant 0 : i32
    return %c0_i32, %c0_i32_0 : i32, i32
  }
  func.func @transform_4(%arg0: i32) -> (i32, i32) {
    %c0_i32 = arith.constant 0 : i32
    %c0_i32_0 = arith.constant 0 : i32
    %c0_i32_1 = arith.constant 0 : i32
    return %c0_i32, %c0_i32_0 : i32, i32
  }
  func.func @transform_5(%arg0: i32) -> (i32, i32) {
    %c0_i32 = arith.constant 0 : i32
    %c0_i32_0 = arith.constant 0 : i32
    %c0_i32_1 = arith.constant 0 : i32
    return %c0_i32, %c0_i32_0 : i32, i32
  }
  func.func @transform_6(%arg0: i32) -> (i32, i32) {
    %c0_i32 = arith.constant 0 : i32
    %c0_i32_0 = arith.constant 0 : i32
    return %arg0, %c0_i32 : i32, i32
  }
}

</mosaic_0001>

<llo_original>
// kernel: _forward.1
$region0: #{_forward.1}
  #allocation0 [shape = 'u32[]', space=smem, size = 0x4, offset = 0x4, fixed_abs, tag = 'smem constant byte address 0x4 - core index']
  #allocation1 [shape = 'u32[72,128]{1,0:T(1,128)}', space=vmem, size = 0x9000, scoped, tag = 'internal scratch']
  %s0 = inlined_call_operand.vmem [shape: f32[8,8,8], index: 0, kind: input, shape index: {}]
  %s1 = inlined_call_operand.vmem [shape: bf16[8,128], index: 1, kind: input, shape index: {}]
  %s2 = inlined_call_operand.vmem [shape: bf16[32,128], index: 2, kind: input, shape index: {}]
  %s3 = inlined_call_operand.vmem [shape: f32[1,128], index: 3, kind: input, shape index: {}]
  %s4 = inlined_call_operand.vmem [shape: f32[32,128], index: 4, kind: input, shape index: {}]
  %s5 = inlined_call_operand.vmem [shape: f32[1,128], index: 5, kind: input, shape index: {}]
  %s6 = inlined_call_operand.vmem [shape: f32[8,128], index: 6, kind: output, shape index: {}]
  %s7 = sld [smem:[#allocation0]]
  $region34: #{_forward.1} parent=0
    _
  %s9 = ssub.s32 1, %s7
  %s10 = scalar_select 0, %s9, %s7
  // Predicated region
  $region2: #{_forward.1} parent=0 // pred_check
    _
  $region3: #{_forward.1} parent=0 // pred_check_branch
    %12 = sbr.rel (0) target = $region5
  $region4: #{_forward.1} parent=0 // pred_region
    _
  $region5: #{_forward.1} parent=0 // pred_fallthru
    _
  // Predicated region
  $region6: #{_forward.1} parent=0 // pred_check
    _
  $region7: #{_forward.1} parent=0 // pred_check_branch
    %14 = sbr.rel (0) target = $region9
  $region8: #{_forward.1} parent=0 // pred_region
    _
  $region9: #{_forward.1} parent=0 // pred_fallthru
    _
  // Predicated region
  $region10: #{_forward.1} parent=0 // pred_check
    _
  $region11: #{_forward.1} parent=0 // pred_check_branch
    %16 = sbr.rel (0) target = $region13
  $region12: #{_forward.1} parent=0 // pred_region
    _
  $region13: #{_forward.1} parent=0 // pred_fallthru
    _
  // Predicated region
  $region14: #{_forward.1} parent=0 // pred_check
    _
  $region15: #{_forward.1} parent=0 // pred_check_branch
    %18 = sbr.rel (0) target = $region17
  $region16: #{_forward.1} parent=0 // pred_region
    _
  $region17: #{_forward.1} parent=0 // pred_fallthru
    _
  // Predicated region
  $region18: #{_forward.1} parent=0 // pred_check
    _
  $region19: #{_forward.1} parent=0 // pred_check_branch
    %20 = sbr.rel (0) target = $region21
  $region20: #{_forward.1} parent=0 // pred_region
    _
  $region21: #{_forward.1} parent=0 // pred_fallthru
    _
  // Predicated region
  $region22: #{_forward.1} parent=0 // pred_check
    _
  $region23: #{_forward.1} parent=0 // pred_check_branch
    %22 = sbr.rel (0) target = $region25
  $region24: #{_forward.1} parent=0 // pred_region
    _
  $region25: #{_forward.1} parent=0 // pred_fallthru
    _
  %v24 = vld [vmem:[%s0] sm:$0xff]
  %v25 = vld [vmem:[%s0 + $0x8] sm:$0xff]
  %v26 = vld [vmem:[%s0 + $0x10] sm:$0xff]
  %v27 = vld [vmem:[%s0 + $0x18] sm:$0xff]
  %v28 = vld [vmem:[%s0 + $0x20] sm:$0xff]
  %v29 = vld [vmem:[%s0 + $0x28] sm:$0xff]
  %v30 = vld [vmem:[%s0 + $0x30] sm:$0xff]
  %v31 = vld [vmem:[%s0 + $0x38] sm:$0xff]
  %v32 = vpack.c.bf16 %v25, %v24
  %v33 = vpack.c.bf16 %v27, %v26
  %v34 = vpack.c.bf16 %v29, %v28
  %v35 = vpack.c.bf16 %v31, %v30
  %v36 = vld [vmem:[%s1] sm:$0xf]
  %v37 = vld [vmem:[%s3] sm:$0x1]
  %v39 = vperm.slane %v37, 0
  %vm41 = vcmask 64512
  %v43 = vsel %vm41, %v32, 0
  %v46 = vsel %vm41, %v33, 0
  %v49 = vsel %vm41, %v34, 0
  %v52 = vsel %vm41, %v35, 0
  %vm54 = vcmask 1043456
  %v56 = vsel %vm54, %v36, 0
  %58 = vmatpush.bf16.msra.mxu0 0
  %59 = vmatpush.bf16.msra.mxu0 0
  %60 = vmatpush.bf16.msra.mxu0 0
  %61 = vmatpush.bf16.msra.mxu0 0
  %62 = vmatpush.bf16.msra.mxu0 0
  %63 = vmatpush.bf16.msra.mxu0 0
  %64 = vmatpush.bf16.msra.mxu0 0
  %65 = vmatpush.bf16.msra.mxu0 %v56
  %66 = vmatmul.bf16.gmra.mxu0 %v43
  %v67 = vpop.f32.mrf.mxu0
  %v68 = vadd.f32 %v39, %v67
  %v69 = vpop.f32.mrf.mxu0
  %v70 = vadd.f32 %v39, %v69
  %71 = vmatmul.bf16.gmra.mxu0 %v46
  %v72 = vpop.f32.mrf.mxu0
  %v73 = vadd.f32 %v39, %v72
  %v74 = vpop.f32.mrf.mxu0
  %v75 = vadd.f32 %v39, %v74
  %76 = vmatmul.bf16.gmra.mxu0 %v49
  %v77 = vpop.f32.mrf.mxu0
  %v78 = vadd.f32 %v39, %v77
  %v79 = vpop.f32.mrf.mxu0
  %v80 = vadd.f32 %v39, %v79
  %81 = vmatmul.bf16.gmra.mxu0 %v52
  %v82 = vpop.f32.mrf.mxu0
  %v83 = vadd.f32 %v39, %v82
  %v84 = vpop.f32.mrf.mxu0
  %v85 = vadd.f32 %v39, %v84
  %86 = vdwg.mxu0
  %v87 = vld [vmem:[%s2] sm:$0xf]
  %v88 = vld [vmem:[%s2 + $0x4] sm:$0xf]
  %v89 = vld [vmem:[%s2 + $0x8] sm:$0xf]
  %v90 = vld [vmem:[%s2 + $0xc] sm:$0xf]
  %v95 = vunpack.c.l.b16 %v87
  %v96 = vunpack.c.l.b16 %v88
  %v97 = vunpack.c.l.b16 %v89
  %v98 = vunpack.c.l.b16 %v90
  %v99 = vpack.c.b16 %v96, %v95
  %v100 = vpack.c.b16 %v98, %v97
  %vm103 = vcmask 261120
  %v105 = vsel %vm103, 0, 0
  %107 = vmatpush.bf16.msra.mxu0 0
  %108 = vmatpush.bf16.msra.mxu0 0
  %109 = vmatpush.bf16.msra.mxu0 0
  %110 = vmatpush.bf16.msra.mxu0 0
  %111 = vmatpush.bf16.msra.mxu0 0
  %112 = vmatpush.bf16.msra.mxu0 0
  %113 = vmatpush.bf16.msra.mxu0 %v100
  %114 = vmatpush.bf16.msra.mxu0 %v99
  %115 = vmatmul.bf16.gmra.mxu0 %v105
  %v116 = vpop.f32.mrf.mxu0
  %v117 = vadd.f32 0.0, %v116
  %v118 = vpop.f32.mrf.mxu0
  %119 = vdwg.mxu0
  %v120 = vadd.f32 %v68, %v117
  %v121 = vxor.u32 %v120, 2147483648
  %v122 = vmul.f32 %v121, 1.442695
  %v123 = vpow.pop %v122
  %v124 = vadd.f32 %v123, 1.0
  %v125 = vrcp.pop %v124
  %v126 = vmul.f32 %v124, %v125
  %v127 = vsub.f32 1.0, %v126
  %v128 = vmul.f32 %v125, %v127
  %v129 = vadd.f32 %v125, %v128
  %vm130 = vweird.f32 %v124
  %vm131 = vweird.f32 %v125
  %vm132 = vmor %vm130, %vm131
  %v133 = vsel %vm132, %v125, %v129
  %v134 = vand.u32 2147483647, %v124
  %vm135 = vcmp.eq.f32.partialorder %v134, 8.507059e+37
  %v136 = vand.u32 %v124, 2147483648
  %v137 = vor.u32 1.1754944e-38, %v136
  %v138 = vsel %vm135, %v137, %v133
  %v139 = vmul.f32 1.0, %v138
  %v140 = vmul.f32 %v139, 2.0
  %v141 = vsub.f32 %v140, 1.0
  %v142 = vmul.f32 %v139, 0.0
  %144 = vrot.lane.b32.xlu0 %v141, 64
  %v145 = vpop.permute.xlu0 %144
  %v147 = vmul.f32 %v139, %v145
  %149 = vrot.lane.b32.xlu0 %v147, 32
  %v150 = vpop.permute.xlu0 %149
  %v152 = vadd.f32 %v142, %v150
  %v153 = vtanh.pop %v152
  %155 = vrot.lane.b32.xlu0 %v153, 64
  %v156 = vpop.permute.xlu0 %155
  %v158 = vmul.f32 %v139, %v156
  %v159 = vpack.c.bf16 %v158, %v158
  %161 = vrot.lane.b32.xlu0 %v159, 32
  %v162 = vpop.permute.xlu0 %161
  %v164 = vsel %vm103, %v162, 0
  %166 = vmatpush.bf16.msra.mxu0 0
  %167 = vmatpush.bf16.msra.mxu0 0
  %168 = vmatpush.bf16.msra.mxu0 0
  %169 = vmatpush.bf16.msra.mxu0 0
  %170 = vmatpush.bf16.msra.mxu0 0
  %171 = vmatpush.bf16.msra.mxu0 0
  %172 = vmatpush.bf16.msra.mxu0 %v100
  %173 = vmatpush.bf16.msra.mxu0 %v99
  %174 = vmatmul.bf16.gmra.mxu0 %v164
  %v175 = vpop.f32.mrf.mxu0
  %v176 = vadd.f32 0.0, %v175
  %v177 = vpop.f32.mrf.mxu0
  %178 = vdwg.mxu0
  %v179 = vadd.f32 %v70, %v176
  %v180 = vxor.u32 %v179, 2147483648
  %v181 = vmul.f32 %v180, 1.442695
  %v182 = vpow.pop %v181
  %v183 = vadd.f32 %v182, 1.0
  %v184 = vrcp.pop %v183
  %v185 = vmul.f32 %v183, %v184
  %v186 = vsub.f32 1.0, %v185
  %v187 = vmul.f32 %v184, %v186
  %v188 = vadd.f32 %v184, %v187
  %vm189 = vweird.f32 %v183
  %vm190 = vweird.f32 %v184
  %vm191 = vmor %vm189, %vm190
  %v192 = vsel %vm191, %v184, %v188
  %v193 = vand.u32 2147483647, %v183
  %vm194 = vcmp.eq.f32.partialorder %v193, 8.507059e+37
  %v195 = vand.u32 %v183, 2147483648
  %v196 = vor.u32 1.1754944e-38, %v195
  %v197 = vsel %vm194, %v196, %v192
  %v198 = vmul.f32 1.0, %v197
  %v199 = vmul.f32 %v198, 2.0
  %v200 = vsub.f32 %v199, 1.0
  %v201 = vmul.f32 %v198, %v152
  %203 = vrot.lane.b32.xlu0 %v200, 64
  %v204 = vpop.permute.xlu0 %203
  %v206 = vmul.f32 %v198, %v204
  %208 = vrot.lane.b32.xlu0 %v206, 32
  %v209 = vpop.permute.xlu0 %208
  %v211 = vadd.f32 %v201, %v209
  %v212 = vtanh.pop %v211
  %214 = vrot.lane.b32.xlu0 %v212, 64
  %v215 = vpop.permute.xlu0 %214
  %v217 = vmul.f32 %v198, %v215
  %v218 = vpack.c.bf16 %v217, %v217
  %220 = vrot.lane.b32.xlu0 %v218, 32
  %v221 = vpop.permute.xlu0 %220
  %v223 = vsel %vm103, %v221, 0
  %225 = vmatpush.bf16.msra.mxu0 0
  %226 = vmatpush.bf16.msra.mxu0 0
  %227 = vmatpush.bf16.msra.mxu0 0
  %228 = vmatpush.bf16.msra.mxu0 0
  %229 = vmatpush.bf16.msra.mxu0 0
  %230 = vmatpush.bf16.msra.mxu0 0
  %231 = vmatpush.bf16.msra.mxu0 %v100
  %232 = vmatpush.bf16.msra.mxu0 %v99
  %233 = vmatmul.bf16.gmra.mxu0 %v223
  %v234 = vpop.f32.mrf.mxu0
  %v235 = vadd.f32 0.0, %v234
  %v236 = vpop.f32.mrf.mxu0
  %237 = vdwg.mxu0
  %v238 = vadd.f32 %v73, %v235
  %v239 = vxor.u32 %v238, 2147483648
  %v240 = vmul.f32 %v239, 1.442695
  %v241 = vpow.pop %v240
  %v242 = vadd.f32 %v241, 1.0
  %v243 = vrcp.pop %v242
  %v244 = vmul.f32 %v242, %v243
  %v245 = vsub.f32 1.0, %v244
  %v246 = vmul.f32 %v243, %v245
  %v247 = vadd.f32 %v243, %v246
  %vm248 = vweird.f32 %v242
  %vm249 = vweird.f32 %v243
  %vm250 = vmor %vm248, %vm249
  %v251 = vsel %vm250, %v243, %v247
  %v252 = vand.u32 2147483647, %v242
  %vm253 = vcmp.eq.f32.partialorder %v252, 8.507059e+37
  %v254 = vand.u32 %v242, 2147483648
  %v255 = vor.u32 1.1754944e-38, %v254
  %v256 = vsel %vm253, %v255, %v251
  %v257 = vmul.f32 1.0, %v256
  %v258 = vmul.f32 %v257, 2.0
  %v259 = vsub.f32 %v258, 1.0
  %v260 = vmul.f32 %v257, %v211
  %262 = vrot.lane.b32.xlu0 %v259, 64
  %v263 = vpop.permute.xlu0 %262
  %v265 = vmul.f32 %v257, %v263
  %267 = vrot.lane.b32.xlu0 %v265, 32
  %v268 = vpop.permute.xlu0 %267
  %v270 = vadd.f32 %v260, %v268
  %v271 = vtanh.pop %v270
  %273 = vrot.lane.b32.xlu0 %v271, 64
  %v274 = vpop.permute.xlu0 %273
  %v276 = vmul.f32 %v257, %v274
  %v277 = vpack.c.bf16 %v276, %v276
  %279 = vrot.lane.b32.xlu0 %v277, 32
  %v280 = vpop.permute.xlu0 %279
  %v282 = vsel %vm103, %v280, 0
  %284 = vmatpush.bf16.msra.mxu0 0
  %285 = vmatpush.bf16.msra.mxu0 0
  %286 = vmatpush.bf16.msra.mxu0 0
  %287 = vmatpush.bf16.msra.mxu0 0
  %288 = vmatpush.bf16.msra.mxu0 0
  %289 = vmatpush.bf16.msra.mxu0 0
  %290 = vmatpush.bf16.msra.mxu0 %v100
  %291 = vmatpush.bf16.msra.mxu0 %v99
  %292 = vmatmul.bf16.gmra.mxu0 %v282
  %v293 = vpop.f32.mrf.mxu0
  %v294 = vadd.f32 0.0, %v293
  %v295 = vpop.f32.mrf.mxu0
  %296 = vdwg.mxu0
  %v297 = vadd.f32 %v75, %v294
  %v298 = vxor.u32 %v297, 2147483648
  %v299 = vmul.f32 %v298, 1.442695
  %v300 = vpow.pop %v299
  %v301 = vadd.f32 %v300, 1.0
  %v302 = vrcp.pop %v301
  %v303 = vmul.f32 %v301, %v302
  %v304 = vsub.f32 1.0, %v303
  %v305 = vmul.f32 %v302, %v304
  %v306 = vadd.f32 %v302, %v305
  %vm307 = vweird.f32 %v301
  %vm308 = vweird.f32 %v302
  %vm309 = vmor %vm307, %vm308
  %v310 = vsel %vm309, %v302, %v306
  %v311 = vand.u32 2147483647, %v301
  %vm312 = vcmp.eq.f32.partialorder %v311, 8.507059e+37
  %v313 = vand.u32 %v301, 2147483648
  %v314 = vor.u32 1.1754944e-38, %v313
  %v315 = vsel %vm312, %v314, %v310
  %v316 = vmul.f32 1.0, %v315
  %v317 = vmul.f32 %v316, 2.0
  %v318 = vsub.f32 %v317, 1.0
  %v319 = vmul.f32 %v316, %v270
  %321 = vrot.lane.b32.xlu0 %v318, 64
  %v322 = vpop.permute.xlu0 %321
  %v324 = vmul.f32 %v316, %v322
  %326 = vrot.lane.b32.xlu0 %v324, 32
  %v327 = vpop.permute.xlu0 %326
  %v329 = vadd.f32 %v319, %v327
  %v330 = vtanh.pop %v329
  %332 = vrot.lane.b32.xlu0 %v330, 64
  %v333 = vpop.permute.xlu0 %332
  %v335 = vmul.f32 %v316, %v333
  %v336 = vpack.c.bf16 %v335, %v335
  %338 = vrot.lane.b32.xlu0 %v336, 32
  %v339 = vpop.permute.xlu0 %338
  %v341 = vsel %vm103, %v339, 0
  %343 = vmatpush.bf16.msra.mxu0 0
  %344 = vmatpush.bf16.msra.mxu0 0
  %345 = vmatpush.bf16.msra.mxu0 0
  %346 = vmatpush.bf16.msra.mxu0 0
  %347 = vmatpush.bf16.msra.mxu0 0
  %348 = vmatpush.bf16.msra.mxu0 0
  %349 = vmatpush.bf16.msra.mxu0 %v100
  %350 = vmatpush.bf16.msra.mxu0 %v99
  %351 = vmatmul.bf16.gmra.mxu0 %v341
  %v352 = vpop.f32.mrf.mxu0
  %v353 = vadd.f32 0.0, %v352
  %v354 = vpop.f32.mrf.mxu0
  %355 = vdwg.mxu0
  %v356 = vadd.f32 %v78, %v353
  %v357 = vxor.u32 %v356, 2147483648
  %v358 = vmul.f32 %v357, 1.442695
  %v359 = vpow.pop %v358
  %v360 = vadd.f32 %v359, 1.0
  %v361 = vrcp.pop %v360
  %v362 = vmul.f32 %v360, %v361
  %v363 = vsub.f32 1.0, %v362
  %v364 = vmul.f32 %v361, %v363
  %v365 = vadd.f32 %v361, %v364
  %vm366 = vweird.f32 %v360
  %vm367 = vweird.f32 %v361
  %vm368 = vmor %vm366, %vm367
  %v369 = vsel %vm368, %v361, %v365
  %v370 = vand.u32 2147483647, %v360
  %vm371 = vcmp.eq.f32.partialorder %v370, 8.507059e+37
  %v372 = vand.u32 %v360, 2147483648
  %v373 = vor.u32 1.1754944e-38, %v372
  %v374 = vsel %vm371, %v373, %v369
  %v375 = vmul.f32 1.0, %v374
  %v376 = vmul.f32 %v375, 2.0
  %v377 = vsub.f32 %v376, 1.0
  %v378 = vmul.f32 %v375, %v329
  %380 = vrot.lane.b32.xlu0 %v377, 64
  %v381 = vpop.permute.xlu0 %380
  %v383 = vmul.f32 %v375, %v381
  %385 = vrot.lane.b32.xlu0 %v383, 32
  %v386 = vpop.permute.xlu0 %385
  %v388 = vadd.f32 %v378, %v386
  %v389 = vtanh.pop %v388
  %391 = vrot.lane.b32.xlu0 %v389, 64
  %v392 = vpop.permute.xlu0 %391
  %v394 = vmul.f32 %v375, %v392
  %v395 = vpack.c.bf16 %v394, %v394
  %397 = vrot.lane.b32.xlu0 %v395, 32
  %v398 = vpop.permute.xlu0 %397
  %v400 = vsel %vm103, %v398, 0
  %402 = vmatpush.bf16.msra.mxu0 0
  %403 = vmatpush.bf16.msra.mxu0 0
  %404 = vmatpush.bf16.msra.mxu0 0
  %405 = vmatpush.bf16.msra.mxu0 0
  %406 = vmatpush.bf16.msra.mxu0 0
  %407 = vmatpush.bf16.msra.mxu0 0
  %408 = vmatpush.bf16.msra.mxu0 %v100
  %409 = vmatpush.bf16.msra.mxu0 %v99
  %410 = vmatmul.bf16.gmra.mxu0 %v400
  %v411 = vpop.f32.mrf.mxu0
  %v412 = vadd.f32 0.0, %v411
  %v413 = vpop.f32.mrf.mxu0
  %414 = vdwg.mxu0
  %v415 = vadd.f32 %v80, %v412
  %v416 = vxor.u32 %v415, 2147483648
  %v417 = vmul.f32 %v416, 1.442695
  %v418 = vpow.pop %v417
  %v419 = vadd.f32 %v418, 1.0
  %v420 = vrcp.pop %v419
  %v421 = vmul.f32 %v419, %v420
  %v422 = vsub.f32 1.0, %v421
  %v423 = vmul.f32 %v420, %v422
  %v424 = vadd.f32 %v420, %v423
  %vm425 = vweird.f32 %v419
  %vm426 = vweird.f32 %v420
  %vm427 = vmor %vm425, %vm426
  %v428 = vsel %vm427, %v420, %v424
  %v429 = vand.u32 2147483647, %v419
  %vm430 = vcmp.eq.f32.partialorder %v429, 8.507059e+37
  %v431 = vand.u32 %v419, 2147483648
  %v432 = vor.u32 1.1754944e-38, %v431
  %v433 = vsel %vm430, %v432, %v428
  %v434 = vmul.f32 1.0, %v433
  %v435 = vmul.f32 %v434, 2.0
  %v436 = vsub.f32 %v435, 1.0
  %v437 = vmul.f32 %v434, %v388
  %439 = vrot.lane.b32.xlu0 %v436, 64
  %v440 = vpop.permute.xlu0 %439
  %v442 = vmul.f32 %v434, %v440
  %444 = vrot.lane.b32.xlu0 %v442, 32
  %v445 = vpop.permute.xlu0 %444
  %v447 = vadd.f32 %v437, %v445
  %v448 = vtanh.pop %v447
  %450 = vrot.lane.b32.xlu0 %v448, 64
  %v451 = vpop.permute.xlu0 %450
  %v453 = vmul.f32 %v434, %v451
  %v454 = vpack.c.bf16 %v453, %v453
  %456 = vrot.lane.b32.xlu0 %v454, 32
  %v457 = vpop.permute.xlu0 %456
  %v459 = vsel %vm103, %v457, 0
  %461 = vmatpush.bf16.msra.mxu0 0
  %462 = vmatpush.bf16.msra.mxu0 0
  %463 = vmatpush.bf16.msra.mxu0 0
  %464 = vmatpush.bf16.msra.mxu0 0
  %465 = vmatpush.bf16.msra.mxu0 0
  %466 = vmatpush.bf16.msra.mxu0 0
  %467 = vmatpush.bf16.msra.mxu0 %v100
  %468 = vmatpush.bf16.msra.mxu0 %v99
  %469 = vmatmul.bf16.gmra.mxu0 %v459
  %v470 = vpop.f32.mrf.mxu0
  %v471 = vadd.f32 0.0, %v470
  %v472 = vpop.f32.mrf.mxu0
  %473 = vdwg.mxu0
  %v474 = vadd.f32 %v83, %v471
  %v475 = vxor.u32 %v474, 2147483648
  %v476 = vmul.f32 %v475, 1.442695
  %v477 = vpow.pop %v476
  %v478 = vadd.f32 %v477, 1.0
  %v479 = vrcp.pop %v478
  %v480 = vmul.f32 %v478, %v479
  %v481 = vsub.f32 1.0, %v480
  %v482 = vmul.f32 %v479, %v481
  %v483 = vadd.f32 %v479, %v482
  %vm484 = vweird.f32 %v478
  %vm485 = vweird.f32 %v479
  %vm486 = vmor %vm484, %vm485
  %v487 = vsel %vm486, %v479, %v483
  %v488 = vand.u32 2147483647, %v478
  %vm489 = vcmp.eq.f32.partialorder %v488, 8.507059e+37
  %v490 = vand.u32 %v478, 2147483648
  %v491 = vor.u32 1.1754944e-38, %v490
  %v492 = vsel %vm489, %v491, %v487
  %v493 = vmul.f32 1.0, %v492
  %v494 = vmul.f32 %v493, 2.0
  %v495 = vsub.f32 %v494, 1.0
  %v496 = vmul.f32 %v493, %v447
  %498 = vrot.lane.b32.xlu0 %v495, 64
  %v499 = vpop.permute.xlu0 %498
  %v501 = vmul.f32 %v493, %v499
  %503 = vrot.lane.b32.xlu0 %v501, 32
  %v504 = vpop.permute.xlu0 %503
  %v506 = vadd.f32 %v496, %v504
  %v507 = vtanh.pop %v506
  %509 = vrot.lane.b32.xlu0 %v507, 64
  %v510 = vpop.permute.xlu0 %509
  %v512 = vmul.f32 %v493, %v510
  %v513 = vpack.c.bf16 %v512, %v512
  %515 = vrot.lane.b32.xlu0 %v513, 32
  %v516 = vpop.permute.xlu0 %515
  %v518 = vsel %vm103, %v516, 0
  %520 = vmatpush.bf16.msra.mxu0 0
  %521 = vmatpush.bf16.msra.mxu0 0
  %522 = vmatpush.bf16.msra.mxu0 0
  %523 = vmatpush.bf16.msra.mxu0 0
  %524 = vmatpush.bf16.msra.mxu0 0
  %525 = vmatpush.bf16.msra.mxu0 0
  %526 = vmatpush.bf16.msra.mxu0 %v100
  %527 = vmatpush.bf16.msra.mxu0 %v99
  %528 = vmatmul.bf16.gmra.mxu0 %v518
  %v529 = vpop.f32.mrf.mxu0
  %v530 = vadd.f32 0.0, %v529
  %v531 = vpop.f32.mrf.mxu0
  %532 = vdwg.mxu0
  %v533 = vadd.f32 %v85, %v530
  %v534 = vxor.u32 %v533, 2147483648
  %v535 = vmul.f32 %v534, 1.442695
  %v536 = vpow.pop %v535
  %v537 = vadd.f32 %v536, 1.0
  %v538 = vrcp.pop %v537
  %v539 = vmul.f32 %v537, %v538
  %v540 = vsub.f32 1.0, %v539
  %v541 = vmul.f32 %v538, %v540
  %v542 = vadd.f32 %v538, %v541
  %vm543 = vweird.f32 %v537
  %vm544 = vweird.f32 %v538
  %vm545 = vmor %vm543, %vm544
  %v546 = vsel %vm545, %v538, %v542
  %v547 = vand.u32 2147483647, %v537
  %vm548 = vcmp.eq.f32.partialorder %v547, 8.507059e+37
  %v549 = vand.u32 %v537, 2147483648
  %v550 = vor.u32 1.1754944e-38, %v549
  %v551 = vsel %vm548, %v550, %v546
  %v552 = vmul.f32 1.0, %v551
  %v553 = vmul.f32 %v552, 2.0
  %v554 = vsub.f32 %v553, 1.0
  %v555 = vmul.f32 %v552, %v506
  %557 = vrot.lane.b32.xlu0 %v554, 64
  %v558 = vpop.permute.xlu0 %557
  %v560 = vmul.f32 %v552, %v558
  %562 = vrot.lane.b32.xlu0 %v560, 32
  %v563 = vpop.permute.xlu0 %562
  %v565 = vadd.f32 %v555, %v563
  %v566 = vtanh.pop %v565
  %568 = vrot.lane.b32.xlu0 %v566, 64
  %v569 = vpop.permute.xlu0 %568
  %v571 = vmul.f32 %v552, %v569
  %v572 = vld [vmem:[%s4] sm:$0xff]
  %v573 = vld [vmem:[%s4 + $0x8] sm:$0xff]
  %v574 = vld [vmem:[%s4 + $0x10] sm:$0xff]
  %v575 = vld [vmem:[%s4 + $0x18] sm:$0xff]
  %v576 = vld [vmem:[%s5] sm:$0x1]
  %v578 = vperm.slane %v576, 0
  %581 = vrot.lane.b32.xlu0 %v571, 32
  %v582 = vpop.permute.xlu0 %581
  %v583 = vsel %vm103, %v582, 0
  %585 = vmatpush.msra.mxu0 0.0
  %586 = vmatpush.msra.mxu0 0.0
  %587 = vmatpush.msra.mxu0 0.0
  %588 = vmatpush.msra.mxu0 0.0
  %589 = vmatpush.msra.mxu0 0.0
  %590 = vmatpush.msra.mxu0 0.0
  %591 = vmatpush.msra.mxu0 0.0
  %592 = vmatpush.msra.mxu0 0.0
  %593 = vmatpush.msra.mxu0 0.0
  %594 = vmatpush.msra.mxu0 0.0
  %595 = vmatpush.msra.mxu0 0.0
  %596 = vmatpush.msra.mxu0 0.0
  %597 = vmatpush.msra.mxu0 %v575
  %598 = vmatpush.msra.mxu0 %v574
  %599 = vmatpush.msra.mxu0 %v573
  %600 = vmatpush.msra.mxu0 %v572
  %601 = vmatmul.f32.gmra.mxu0 %v583
  %v602 = vpop.f32.mrf.mxu0
  %v603 = vadd.f32 %v578, %v602
  %604 = vdwg.mxu0
  %605 = vst [vmem:[%s6] sm:$0xff] %v603
  // Predicated region
  $region26: #{_forward.1} parent=0 // pred_check
    _
  $region27: #{_forward.1} parent=0 // pred_check_branch
    %607 = sbr.rel (0) target = $region29
  $region28: #{_forward.1} parent=0 // pred_region
    _
  $region29: #{_forward.1} parent=0 // pred_fallthru
    _
  // Predicated region
  $region30: #{_forward.1} parent=0 // pred_check
    _
  $region31: #{_forward.1} parent=0 // pred_check_branch
    %609 = sbr.rel (0) target = $region33
  $region32: #{_forward.1} parent=0 // pred_region
    _
  $region33: #{_forward.1} parent=0 // pred_fallthru
    _

</llo_original>
